<compile_context>
chip_gen: v5e
topology: v5e:2x2
jax: 0.10.0
libtpu: 0.0.40
codegen_flags: <defaults>
</compile_context>

<pallas_src>
import numpy as np
import jax
import jax.numpy as jnp
from jax.experimental import pallas as pl
from jax.experimental.pallas import tpu as pltpu

# ----------------------------------------------------------------------------
# Deterministic construction of the fixed unitaries (ported from the PyTorch
# module; all matrices involved are real so we build them in float64).
# ----------------------------------------------------------------------------
_H2 = np.array([[1.0, 1.0], [1.0, -1.0]], dtype=np.float64) / np.sqrt(2.0)
_X2 = np.array([[0.0, 1.0], [1.0, 0.0]], dtype=np.float64)
_I2 = np.eye(2, dtype=np.float64)


def _get_cnot(control, target, qubits):
    swap = True
    if control > target:
        swap = False
        control, target = target, control
    diff = target - control
    if diff > 1:
        scaler = np.eye(2 ** (diff - 1), dtype=np.float64)
        upper = np.kron(scaler, _I2)
        lower = np.kron(scaler, _X2)
    else:
        upper = _I2
        lower = _X2
    p0 = np.array([[1.0, 0.0], [0.0, 0.0]], dtype=np.float64)
    p1 = np.array([[0.0, 0.0], [0.0, 1.0]], dtype=np.float64)
    unitary = np.kron(p0, upper) + np.kron(p1, lower)
    if swap:
        swap_matrix = _H2
        for _ in range(1, diff + 1):
            swap_matrix = np.kron(swap_matrix, _H2)
        unitary = swap_matrix @ unitary @ swap_matrix
    if qubits > diff + 1:
        bits_before = int(control - 1)
        bits_after = int(qubits - target)
        unitary = np.kron(
            np.eye(2 ** bits_after, dtype=np.float64),
            np.kron(unitary, np.eye(2 ** bits_before, dtype=np.float64)),
        )
    return unitary


def _get_cnot_ring(qubits):
    unitary = _get_cnot(1, 2, qubits)
    for i in range(2, qubits):
        unitary = _get_cnot(i, i + 1, qubits) @ unitary
    unitary = _get_cnot(qubits, 1, qubits) @ unitary
    return unitary


def _get_hadamard(qubits):
    unitary = _H2
    for _ in range(1, qubits):
        unitary = np.kron(unitary, _H2)
    return unitary


def build_fused_unitary(qubits):
    """U_k such that  (A @ X @ B).reshape(-1) == X.reshape(-1) @ U_k  (row-major).

    With A = U_cnot, B = U_had:  vec_r(A X B) = vec_r(X) @ kron(A^T, B).
    Computed in float64 on the host, stored as float32.
    """
    a = _get_cnot_ring(qubits)      # (D, D) float64
    b = _get_hadamard(qubits)       # (D, D) float64
    u_k = np.kron(a.T, b)           # (D*D, D*D) float64
    return jnp.asarray(u_k, dtype=jnp.float32), a, b


# ----------------------------------------------------------------------------
# Pallas kernel: single grid step, one resident 256x256 unitary, two lane-dense
# (B, 256) x (256, 256) matmuls (real plane and imaginary plane).
# ----------------------------------------------------------------------------
def _hcnot_fused_kernel(u_ref, xr_ref, xi_ref, or_ref, oi_ref):
    u = u_ref[...]
    or_ref[...] = jnp.dot(xr_ref[...], u, preferred_element_type=jnp.float32)
    oi_ref[...] = jnp.dot(xi_ref[...], u, preferred_element_type=jnp.float32)


def hcnot_forward(x_complex, u_k):
    """x_complex: complex64 (B, D, D). u_k: float32 (D*D, D*D). Returns complex64 (B, D, D)."""
    B, D, _ = x_complex.shape
    n = D * D

    # Real/imag split + flatten; these fuse into the pallas_call operands (no
    # standalone HBM concatenate pass).
    xr = jnp.real(x_complex).reshape(B, n).astype(jnp.float32)
    xi = jnp.imag(x_complex).reshape(B, n).astype(jnp.float32)

    yr, yi = pl.pallas_call(
        _hcnot_fused_kernel,
        out_shape=(
            jax.ShapeDtypeStruct((B, n), jnp.float32),
            jax.ShapeDtypeStruct((B, n), jnp.float32),
        ),
        grid=(1,),  # whole problem in one block: no per-step pipeline overhead
        in_specs=[
            pl.BlockSpec((n, n), lambda i: (0, 0)),  # fused unitary U_k
            pl.BlockSpec((B, n), lambda i: (0, 0)),  # real plane  (lane-dense, 256 lanes)
            pl.BlockSpec((B, n), lambda i: (0, 0)),  # imag plane
        ],
        out_specs=(
            pl.BlockSpec((B, n), lambda i: (0, 0)),
            pl.BlockSpec((B, n), lambda i: (0, 0)),
        ),
        compiler_params=pltpu.CompilerParams(
            dimension_semantics=("arbitrary",),
        ),
    )(u_k, xr, xi)

    y = (yr + 1j * yi).astype(jnp.complex64)
    return y.reshape(B, D, D)


if __name__ == "__main__":
    qubits = 4
    D = 2 ** qubits          # 16
    batch = 2

    # Fixed fused unitary (deterministic, derived from the module construction).
    u_k, u_cnot_np, u_had_np = build_fused_unitary(qubits)   # (256, 256) f32

    # Deterministic complex input, shape (batch, D, D).
    key = jax.random.PRNGKey(0)
    kr, ki = jax.random.split(key)
    x_real = jax.random.normal(kr, (batch, D, D), dtype=jnp.float32)
    x_imag = jax.random.normal(ki, (batch, D, D), dtype=jnp.float32)
    x = (x_real + 1j * x_imag).astype(jnp.complex64)

    y = hcnot_forward(x, u_k)
    y = jax.block_until_ready(y)

    # Sanity check against a float64 host reference of the same math:
    #   y = U_cnot @ x @ U_had
    x_np = np.asarray(x)
    y_ref = np.einsum("ij,bjk,kl->bil", u_cnot_np, x_np, u_had_np)
    np.testing.assert_allclose(np.asarray(y), y_ref.astype(np.complex64),
                               rtol=1e-4, atol=1e-4)

    print("KERNEL_OK")
</pallas_src>

<mosaic_0001>
module attributes {stable_mosaic.version = 11 : i64} {
  func.func @_hcnot_fused_kernel(%arg0: i32, %arg1: memref<256x256xf32, #tpu.memory_space<vmem>>, %arg2: memref<2x256xf32, #tpu.memory_space<vmem>>, %arg3: memref<2x256xf32, #tpu.memory_space<vmem>>, %arg4: memref<2x256xf32, #tpu.memory_space<vmem>>, %arg5: memref<2x256xf32, #tpu.memory_space<vmem>>) attributes {dimension_semantics = [#tpu.dimension_semantics<arbitrary>], iteration_bounds = array<i64: 1>, scalar_prefetch = 0 : i64, scratch_operands = 0 : i64, tpu.core_type = #tpu.core_type<tc>, window_params = [{pipeline_mode = #tpu.pipeline_mode<synchronous>, transform_indices = @transform_0, window_bounds = array<i64: 256, 256>}, {pipeline_mode = #tpu.pipeline_mode<synchronous>, transform_indices = @transform_1, window_bounds = array<i64: 2, 256>}, {pipeline_mode = #tpu.pipeline_mode<synchronous>, transform_indices = @transform_2, window_bounds = array<i64: 2, 256>}, {pipeline_mode = #tpu.pipeline_mode<synchronous>, transform_indices = @transform_3, window_bounds = array<i64: 2, 256>}, {pipeline_mode = #tpu.pipeline_mode<synchronous>, transform_indices = @transform_4, window_bounds = array<i64: 2, 256>}]} {
    %c0 = arith.constant 0 : index
    %c0_0 = arith.constant 0 : index
    %0 = vector.load %arg1[%c0, %c0_0] : memref<256x256xf32, #tpu.memory_space<vmem>>, vector<256x256xf32>
    %c0_1 = arith.constant 0 : index
    %c0_2 = arith.constant 0 : index
    %1 = vector.load %arg2[%c0_1, %c0_2] : memref<2x256xf32, #tpu.memory_space<vmem>>, vector<2x256xf32>
    %cst = arith.constant dense<0.000000e+00> : vector<2x256xf32>
    %2 = tpu.matmul %1, %0, %cst {dimension_numbers = #tpu.dot_dimension_numbers<[1], [0], [0], [1], [0, 0, 1, 1], [], []>} : vector<2x256xf32>, vector<256x256xf32>, vector<2x256xf32> -> vector<2x256xf32>
    %c0_3 = arith.constant 0 : index
    %c0_4 = arith.constant 0 : index
    %3 = vector.load %arg4[%c0_3, %c0_4] : memref<2x256xf32, #tpu.memory_space<vmem>>, vector<2x256xf32>
    tpu.vector_store %arg4[%c0_3, %c0_4], %2 {strides = array<i32>} : memref<2x256xf32, #tpu.memory_space<vmem>>, vector<2x256xf32>,
    %c0_5 = arith.constant 0 : index
    %c0_6 = arith.constant 0 : index
    %4 = vector.load %arg3[%c0_5, %c0_6] : memref<2x256xf32, #tpu.memory_space<vmem>>, vector<2x256xf32>
    %cst_7 = arith.constant dense<0.000000e+00> : vector<2x256xf32>
    %5 = tpu.matmul %4, %0, %cst_7 {dimension_numbers = #tpu.dot_dimension_numbers<[1], [0], [0], [1], [0, 0, 1, 1], [], []>} : vector<2x256xf32>, vector<256x256xf32>, vector<2x256xf32> -> vector<2x256xf32>
    %c0_8 = arith.constant 0 : index
    %c0_9 = arith.constant 0 : index
    %6 = vector.load %arg5[%c0_8, %c0_9] : memref<2x256xf32, #tpu.memory_space<vmem>>, vector<2x256xf32>
    tpu.vector_store %arg5[%c0_8, %c0_9], %5 {strides = array<i32>} : memref<2x256xf32, #tpu.memory_space<vmem>>, vector<2x256xf32>,
    return
  }
  func.func @transform_0(%arg0: i32) -> (i32, i32) {
    %c0_i32 = arith.constant 0 : i32
    %c0_i32_0 = arith.constant 0 : i32
    %c0_i32_1 = arith.constant 0 : i32
    return %c0_i32, %c0_i32_0 : i32, i32
  }
  func.func @transform_1(%arg0: i32) -> (i32, i32) {
    %c0_i32 = arith.constant 0 : i32
    %c0_i32_0 = arith.constant 0 : i32
    %c0_i32_1 = arith.constant 0 : i32
    return %c0_i32, %c0_i32_0 : i32, i32
  }
  func.func @transform_2(%arg0: i32) -> (i32, i32) {
    %c0_i32 = arith.constant 0 : i32
    %c0_i32_0 = arith.constant 0 : i32
    %c0_i32_1 = arith.constant 0 : i32
    return %c0_i32, %c0_i32_0 : i32, i32
  }
  func.func @transform_3(%arg0: i32) -> (i32, i32) {
    %c0_i32 = arith.constant 0 : i32
    %c0_i32_0 = arith.constant 0 : i32
    %c0_i32_1 = arith.constant 0 : i32
    return %c0_i32, %c0_i32_0 : i32, i32
  }
  func.func @transform_4(%arg0: i32) -> (i32, i32) {
    %c0_i32 = arith.constant 0 : i32
    %c0_i32_0 = arith.constant 0 : i32
    %c0_i32_1 = arith.constant 0 : i32
    return %c0_i32, %c0_i32_0 : i32, i32
  }
}

</mosaic_0001>

<llo_original>
// kernel: tpu_custom_call.1
$region0: #{tpu_custom_call.1}
  #allocation0 [shape = 'u32[]', space=smem, size = 0x4, offset = 0x4, fixed_abs, tag = 'smem constant byte address 0x4 - core index']
  #allocation1 [shape = 'u32[72,128]{1,0:T(1,128)}', space=vmem, size = 0x9000, scoped, tag = 'internal scratch']
  %s0 = inlined_call_operand.hbm [shape: f32[256,256], index: 0, kind: input, shape index: {}]
  %s1 = inlined_call_operand.hbm [shape: f32[2,256], index: 1, kind: input, shape index: {}]
  %s2 = inlined_call_operand.hbm [shape: f32[2,256], index: 2, kind: input, shape index: {}]
  %s3 = inlined_call_operand.hbm [shape: f32[2,256], index: 3, kind: output, shape index: {0}]
  %s4 = inlined_call_operand.hbm [shape: f32[2,256], index: 4, kind: output, shape index: {1}]
  %5 = xla_tuple %s3, %s4
  %s6 = sld [smem:[#allocation0]]
  $region42: #{tpu_custom_call.1} parent=0
    _
  %s8 = ssub.s32 1, %s6
  %s9 = scalar_select 0, %s8, %s6
  $region1: #{tpu_custom_call.1} parent=0
    #allocation2 [shape = 'u8[262144]{0}', space=vmem, size = 0x40000, scoped, tag = 'input window, operand 0, single buffered']
    #allocation3 [shape = 's32[1]{0}', space=sflag, size = 0x4, scoped, tag = 'scoped memory for tpu_custom_call.1']
    #allocation4 [shape = 's32[1]{0}', space=sflag, size = 0x4, scoped, tag = 'scoped memory for tpu_custom_call.1']
    #allocation5 [shape = 'u8[2048]{0}', space=vmem, size = 0x800, scoped, tag = 'input window, operand 1, single buffered']
    #allocation6 [shape = 's32[1]{0}', space=sflag, size = 0x4, scoped, tag = 'scoped memory for tpu_custom_call.1']
    #allocation7 [shape = 'u8[2048]{0}', space=vmem, size = 0x800, scoped, tag = 'input window, operand 2, single buffered']
    #allocation8 [shape = 'u8[2048]{0}', space=vmem, size = 0x800, scoped, tag = 'output window, operand 0, single buffered']
    #allocation9 [shape = 'u8[2048]{0}', space=vmem, size = 0x800, scoped, tag = 'output window, operand 1, single buffered']
    #allocation10 [shape = 's32[1]{0}', space=sflag, size = 0x4, scoped, tag = 'scoped memory for tpu_custom_call.1']
    %10 = vsyncpa [#allocation3], 0
    %11 = vsyncpa [#allocation6], 0
    %12 = vsyncpa [#allocation4], 0
    %13 = vsyncpa [#allocation10], 0
    // Predicated region
    $region2: #{tpu_custom_call.1} parent=1 // pred_check
      _
    $region3: #{tpu_custom_call.1} parent=1 // pred_check_branch
      %15 = sbr.rel (0) target = $region5
    $region4: #{tpu_custom_call.1} parent=1 // pred_region
      %17 = vsyncadd [#allocation3], 0
      %s18 = sshll.u32 %s0, 4
      %s19 = int_to_ptr.hbm [resolvable:$true] %s18
      %s20 = sshll.u32 [#allocation2], 4
      %s21 = int_to_ptr.vmem [resolvable:$true] %s20
      %26 = dma.hbm_to_vmem [thread:$0]  %s19, 8192, %s21, [#allocation3], 256, 256, 16
    $region5: #{tpu_custom_call.1} parent=1 // pred_fallthru
      _
    // Predicated region
    $region6: #{tpu_custom_call.1} parent=1 // pred_check
      _
    $region7: #{tpu_custom_call.1} parent=1 // pred_check_branch
      %28 = sbr.rel (0) target = $region9
    $region8: #{tpu_custom_call.1} parent=1 // pred_region
      %30 = vsyncadd [#allocation6], 0
      %s32 = sshll.u32 %s1, 4
      %s33 = int_to_ptr.hbm [resolvable:$true] %s32
      %s34 = sshll.u32 [#allocation5], 4
      %s35 = int_to_ptr.vmem [resolvable:$true] %s34
      %37 = dma.hbm_to_vmem [thread:$0]  %s33, 64, %s35, [#allocation6]
    $region9: #{tpu_custom_call.1} parent=1 // pred_fallthru
      _
    // Predicated region
    $region10: #{tpu_custom_call.1} parent=1 // pred_check
      _
    $region11: #{tpu_custom_call.1} parent=1 // pred_check_branch
      %39 = sbr.rel (0) target = $region13
    $region12: #{tpu_custom_call.1} parent=1 // pred_region
      %41 = vsyncadd [#allocation6], 0
      %s43 = sshll.u32 %s2, 4
      %s44 = int_to_ptr.hbm [resolvable:$true] %s43
      %s45 = sshll.u32 [#allocation7], 4
      %s46 = int_to_ptr.vmem [resolvable:$true] %s45
      %48 = dma.hbm_to_vmem [thread:$0]  %s44, 64, %s46, [#allocation6]
    $region13: #{tpu_custom_call.1} parent=1 // pred_fallthru
      _
    // Predicated region
    $region14: #{tpu_custom_call.1} parent=1 // pred_check
      _
    $region15: #{tpu_custom_call.1} parent=1 // pred_check_branch
      %50 = sbr.rel (0) target = $region17
    $region16: #{tpu_custom_call.1} parent=1 // pred_region
      %52 = dma.done [#allocation3], 8192
    $region17: #{tpu_custom_call.1} parent=1 // pred_fallthru
      _
    // Predicated region
    $region18: #{tpu_custom_call.1} parent=1 // pred_check
      _
    $region19: #{tpu_custom_call.1} parent=1 // pred_check_branch
      %54 = sbr.rel (0) target = $region21
    $region20: #{tpu_custom_call.1} parent=1 // pred_region
      %56 = dma.done [#allocation6], 64
    $region21: #{tpu_custom_call.1} parent=1 // pred_fallthru
      _
    // Predicated region
    $region22: #{tpu_custom_call.1} parent=1 // pred_check
      _
    $region23: #{tpu_custom_call.1} parent=1 // pred_check_branch
      %58 = sbr.rel (0) target = $region25
    $region24: #{tpu_custom_call.1} parent=1 // pred_region
      %60 = dma.done [#allocation6], 64
    $region25: #{tpu_custom_call.1} parent=1 // pred_fallthru
      _
    %v61 = vld [vmem:[#allocation2] sm:$0xff]
    %v62 = vld [vmem:[#allocation2 + $0x8] sm:$0xff]
    %v63 = vld [vmem:[#allocation2 + $0x10] sm:$0xff]
    %v64 = vld [vmem:[#allocation2 + $0x18] sm:$0xff]
    %v65 = vld [vmem:[#allocation2 + $0x20] sm:$0xff]
    %v66 = vld [vmem:[#allocation2 + $0x28] sm:$0xff]
    %v67 = vld [vmem:[#allocation2 + $0x30] sm:$0xff]
    %v68 = vld [vmem:[#allocation2 + $0x38] sm:$0xff]
    %v69 = vld [vmem:[#allocation2 + $0x40] sm:$0xff]
    %v70 = vld [vmem:[#allocation2 + $0x48] sm:$0xff]
    %v71 = vld [vmem:[#allocation2 + $0x50] sm:$0xff]
    %v72 = vld [vmem:[#allocation2 + $0x58] sm:$0xff]
    %v73 = vld [vmem:[#allocation2 + $0x60] sm:$0xff]
    %v74 = vld [vmem:[#allocation2 + $0x68] sm:$0xff]
    %v75 = vld [vmem:[#allocation2 + $0x70] sm:$0xff]
    %v76 = vld [vmem:[#allocation2 + $0x78] sm:$0xff]
    %v77 = vld [vmem:[#allocation2 + $0x80] sm:$0xff]
    %v78 = vld [vmem:[#allocation2 + $0x88] sm:$0xff]
    %v79 = vld [vmem:[#allocation2 + $0x90] sm:$0xff]
    %v80 = vld [vmem:[#allocation2 + $0x98] sm:$0xff]
    %v81 = vld [vmem:[#allocation2 + $0xa0] sm:$0xff]
    %v82 = vld [vmem:[#allocation2 + $0xa8] sm:$0xff]
    %v83 = vld [vmem:[#allocation2 + $0xb0] sm:$0xff]
    %v84 = vld [vmem:[#allocation2 + $0xb8] sm:$0xff]
    %v85 = vld [vmem:[#allocation2 + $0xc0] sm:$0xff]
    %v86 = vld [vmem:[#allocation2 + $0xc8] sm:$0xff]
    %v87 = vld [vmem:[#allocation2 + $0xd0] sm:$0xff]
    %v88 = vld [vmem:[#allocation2 + $0xd8] sm:$0xff]
    %v89 = vld [vmem:[#allocation2 + $0xe0] sm:$0xff]
    %v90 = vld [vmem:[#allocation2 + $0xe8] sm:$0xff]
    %v91 = vld [vmem:[#allocation2 + $0xf0] sm:$0xff]
    %v92 = vld [vmem:[#allocation2 + $0xf8] sm:$0xff]
    %v93 = vld [vmem:[#allocation2 + $0x100] sm:$0xff]
    %v94 = vld [vmem:[#allocation2 + $0x108] sm:$0xff]
    %v95 = vld [vmem:[#allocation2 + $0x110] sm:$0xff]
    %v96 = vld [vmem:[#allocation2 + $0x118] sm:$0xff]
    %v97 = vld [vmem:[#allocation2 + $0x120] sm:$0xff]
    %v98 = vld [vmem:[#allocation2 + $0x128] sm:$0xff]
    %v99 = vld [vmem:[#allocation2 + $0x130] sm:$0xff]
    %v100 = vld [vmem:[#allocation2 + $0x138] sm:$0xff]
    %v101 = vld [vmem:[#allocation2 + $0x140] sm:$0xff]
    %v102 = vld [vmem:[#allocation2 + $0x148] sm:$0xff]
    %v103 = vld [vmem:[#allocation2 + $0x150] sm:$0xff]
    %v104 = vld [vmem:[#allocation2 + $0x158] sm:$0xff]
    %v105 = vld [vmem:[#allocation2 + $0x160] sm:$0xff]
    %v106 = vld [vmem:[#allocation2 + $0x168] sm:$0xff]
    %v107 = vld [vmem:[#allocation2 + $0x170] sm:$0xff]
    %v108 = vld [vmem:[#allocation2 + $0x178] sm:$0xff]
    %v109 = vld [vmem:[#allocation2 + $0x180] sm:$0xff]
    %v110 = vld [vmem:[#allocation2 + $0x188] sm:$0xff]
    %v111 = vld [vmem:[#allocation2 + $0x190] sm:$0xff]
    %v112 = vld [vmem:[#allocation2 + $0x198] sm:$0xff]
    %v113 = vld [vmem:[#allocation2 + $0x1a0] sm:$0xff]
    %v114 = vld [vmem:[#allocation2 + $0x1a8] sm:$0xff]
    %v115 = vld [vmem:[#allocation2 + $0x1b0] sm:$0xff]
    %v116 = vld [vmem:[#allocation2 + $0x1b8] sm:$0xff]
    %v117 = vld [vmem:[#allocation2 + $0x1c0] sm:$0xff]
    %v118 = vld [vmem:[#allocation2 + $0x1c8] sm:$0xff]
    %v119 = vld [vmem:[#allocation2 + $0x1d0] sm:$0xff]
    %v120 = vld [vmem:[#allocation2 + $0x1d8] sm:$0xff]
    %v121 = vld [vmem:[#allocation2 + $0x1e0] sm:$0xff]
    %v122 = vld [vmem:[#allocation2 + $0x1e8] sm:$0xff]
    %v123 = vld [vmem:[#allocation2 + $0x1f0] sm:$0xff]
    %v124 = vld [vmem:[#allocation2 + $0x1f8] sm:$0xff]
    %v125 = vld [vmem:[#allocation5] sm:$0xf]
    %127 = vst [vmem:[#allocation1] ss:$4 sm:$0xff] %v125
    %v128 = vld.sshfl [vmem:[#allocation1] sm:$0xff pattern:$0x73625140]
    %v129 = vld.sshfl [vmem:[#allocation1 + $0x8] sm:$0xff pattern:$0x73625140]
    %132 = vmatpush.msra.mxu0 %v91
    %133 = vmatpush.msra.mxu0 %v89
    %134 = vmatpush.msra.mxu0 %v87
    %135 = vmatpush.msra.mxu0 %v85
    %136 = vmatpush.msra.mxu0 %v83
    %137 = vmatpush.msra.mxu0 %v81
    %138 = vmatpush.msra.mxu0 %v79
    %139 = vmatpush.msra.mxu0 %v77
    %140 = vmatpush.msra.mxu0 %v75
    %141 = vmatpush.msra.mxu0 %v73
    %142 = vmatpush.msra.mxu0 %v71
    %143 = vmatpush.msra.mxu0 %v69
    %144 = vmatpush.msra.mxu0 %v67
    %145 = vmatpush.msra.mxu0 %v65
    %146 = vmatpush.msra.mxu0 %v63
    %147 = vmatpush.msra.mxu0 %v61
    %148 = vmatmul.f32.gmra.mxu0 %v128
    %v149 = vpop.f32.mrf.mxu0
    %v150 = vadd.f32 0.0, %v149
    %151 = vdwg.mxu0
    %152 = vmatpush.msra.mxu0 %v123
    %153 = vmatpush.msra.mxu0 %v121
    %154 = vmatpush.msra.mxu0 %v119
    %155 = vmatpush.msra.mxu0 %v117
    %156 = vmatpush.msra.mxu0 %v115
    %157 = vmatpush.msra.mxu0 %v113
    %158 = vmatpush.msra.mxu0 %v111
    %159 = vmatpush.msra.mxu0 %v109
    %160 = vmatpush.msra.mxu0 %v107
    %161 = vmatpush.msra.mxu0 %v105
    %162 = vmatpush.msra.mxu0 %v103
    %163 = vmatpush.msra.mxu0 %v101
    %164 = vmatpush.msra.mxu0 %v99
    %165 = vmatpush.msra.mxu0 %v97
    %166 = vmatpush.msra.mxu0 %v95
    %167 = vmatpush.msra.mxu0 %v93
    %168 = vmatmul.f32.gmra.mxu0 %v129
    %v169 = vpop.f32.mrf.mxu0
    %v170 = vadd.f32 %v150, %v169
    %171 = vdwg.mxu0
    %172 = vmatpush.msra.mxu0 %v92
    %173 = vmatpush.msra.mxu0 %v90
    %174 = vmatpush.msra.mxu0 %v88
    %175 = vmatpush.msra.mxu0 %v86
    %176 = vmatpush.msra.mxu0 %v84
    %177 = vmatpush.msra.mxu0 %v82
    %178 = vmatpush.msra.mxu0 %v80
    %179 = vmatpush.msra.mxu0 %v78
    %180 = vmatpush.msra.mxu0 %v76
    %181 = vmatpush.msra.mxu0 %v74
    %182 = vmatpush.msra.mxu0 %v72
    %183 = vmatpush.msra.mxu0 %v70
    %184 = vmatpush.msra.mxu0 %v68
    %185 = vmatpush.msra.mxu0 %v66
    %186 = vmatpush.msra.mxu0 %v64
    %187 = vmatpush.msra.mxu0 %v62
    %188 = vmatmul.f32.gmra.mxu0 %v128
    %v189 = vpop.f32.mrf.mxu0
    %v190 = vadd.f32 0.0, %v189
    %191 = vdwg.mxu0
    %192 = vmatpush.msra.mxu0 %v124
    %193 = vmatpush.msra.mxu0 %v122
    %194 = vmatpush.msra.mxu0 %v120
    %195 = vmatpush.msra.mxu0 %v118
    %196 = vmatpush.msra.mxu0 %v116
    %197 = vmatpush.msra.mxu0 %v114
    %198 = vmatpush.msra.mxu0 %v112
    %199 = vmatpush.msra.mxu0 %v110
    %200 = vmatpush.msra.mxu0 %v108
    %201 = vmatpush.msra.mxu0 %v106
    %202 = vmatpush.msra.mxu0 %v104
    %203 = vmatpush.msra.mxu0 %v102
    %204 = vmatpush.msra.mxu0 %v100
    %205 = vmatpush.msra.mxu0 %v98
    %206 = vmatpush.msra.mxu0 %v96
    %207 = vmatpush.msra.mxu0 %v94
    %208 = vmatmul.f32.gmra.mxu0 %v129
    %v209 = vpop.f32.mrf.mxu0
    %v210 = vadd.f32 %v190, %v209
    %211 = vdwg.mxu0
    %v214 = vrot.slane %v210, 6
    %vm215 = vcmask 1041408
    %v216 = vsel %vm215, %v170, %v214
    %218 = vst [vmem:[#allocation8] sm:$0xf] %v216
    %v219 = vld [vmem:[#allocation7] sm:$0xf]
    %221 = vst [vmem:[#allocation1] ss:$4 sm:$0xff] %v219
    %v222 = vld.sshfl [vmem:[#allocation1] sm:$0xff pattern:$0x73625140]
    %v223 = vld.sshfl [vmem:[#allocation1 + $0x8] sm:$0xff pattern:$0x73625140]
    %226 = vmatpush.msra.mxu0 %v91
    %227 = vmatpush.msra.mxu0 %v89
    %228 = vmatpush.msra.mxu0 %v87
    %229 = vmatpush.msra.mxu0 %v85
    %230 = vmatpush.msra.mxu0 %v83
    %231 = vmatpush.msra.mxu0 %v81
    %232 = vmatpush.msra.mxu0 %v79
    %233 = vmatpush.msra.mxu0 %v77
    %234 = vmatpush.msra.mxu0 %v75
    %235 = vmatpush.msra.mxu0 %v73
    %236 = vmatpush.msra.mxu0 %v71
    %237 = vmatpush.msra.mxu0 %v69
    %238 = vmatpush.msra.mxu0 %v67
    %239 = vmatpush.msra.mxu0 %v65
    %240 = vmatpush.msra.mxu0 %v63
    %241 = vmatpush.msra.mxu0 %v61
    %242 = vmatmul.f32.gmra.mxu0 %v222
    %v243 = vpop.f32.mrf.mxu0
    %v244 = vadd.f32 0.0, %v243
    %245 = vdwg.mxu0
    %246 = vmatpush.msra.mxu0 %v123
    %247 = vmatpush.msra.mxu0 %v121
    %248 = vmatpush.msra.mxu0 %v119
    %249 = vmatpush.msra.mxu0 %v117
    %250 = vmatpush.msra.mxu0 %v115
    %251 = vmatpush.msra.mxu0 %v113
    %252 = vmatpush.msra.mxu0 %v111
    %253 = vmatpush.msra.mxu0 %v109
    %254 = vmatpush.msra.mxu0 %v107
    %255 = vmatpush.msra.mxu0 %v105
    %256 = vmatpush.msra.mxu0 %v103
    %257 = vmatpush.msra.mxu0 %v101
    %258 = vmatpush.msra.mxu0 %v99
    %259 = vmatpush.msra.mxu0 %v97
    %260 = vmatpush.msra.mxu0 %v95
    %261 = vmatpush.msra.mxu0 %v93
    %262 = vmatmul.f32.gmra.mxu0 %v223
    %v263 = vpop.f32.mrf.mxu0
    %v264 = vadd.f32 %v244, %v263
    %265 = vdwg.mxu0
    %266 = vmatpush.msra.mxu0 %v92
    %267 = vmatpush.msra.mxu0 %v90
    %268 = vmatpush.msra.mxu0 %v88
    %269 = vmatpush.msra.mxu0 %v86
    %270 = vmatpush.msra.mxu0 %v84
    %271 = vmatpush.msra.mxu0 %v82
    %272 = vmatpush.msra.mxu0 %v80
    %273 = vmatpush.msra.mxu0 %v78
    %274 = vmatpush.msra.mxu0 %v76
    %275 = vmatpush.msra.mxu0 %v74
    %276 = vmatpush.msra.mxu0 %v72
    %277 = vmatpush.msra.mxu0 %v70
    %278 = vmatpush.msra.mxu0 %v68
    %279 = vmatpush.msra.mxu0 %v66
    %280 = vmatpush.msra.mxu0 %v64
    %281 = vmatpush.msra.mxu0 %v62
    %282 = vmatmul.f32.gmra.mxu0 %v222
    %v283 = vpop.f32.mrf.mxu0
    %v284 = vadd.f32 0.0, %v283
    %285 = vdwg.mxu0
    %286 = vmatpush.msra.mxu0 %v124
    %287 = vmatpush.msra.mxu0 %v122
    %288 = vmatpush.msra.mxu0 %v120
    %289 = vmatpush.msra.mxu0 %v118
    %290 = vmatpush.msra.mxu0 %v116
    %291 = vmatpush.msra.mxu0 %v114
    %292 = vmatpush.msra.mxu0 %v112
    %293 = vmatpush.msra.mxu0 %v110
    %294 = vmatpush.msra.mxu0 %v108
    %295 = vmatpush.msra.mxu0 %v106
    %296 = vmatpush.msra.mxu0 %v104
    %297 = vmatpush.msra.mxu0 %v102
    %298 = vmatpush.msra.mxu0 %v100
    %299 = vmatpush.msra.mxu0 %v98
    %300 = vmatpush.msra.mxu0 %v96
    %301 = vmatpush.msra.mxu0 %v94
    %302 = vmatmul.f32.gmra.mxu0 %v223
    %v303 = vpop.f32.mrf.mxu0
    %v304 = vadd.f32 %v284, %v303
    %305 = vdwg.mxu0
    %v308 = vrot.slane %v304, 6
    %v309 = vsel %vm215, %v264, %v308
    %311 = vst [vmem:[#allocation9] sm:$0xf] %v309
    // Predicated region
    $region26: #{tpu_custom_call.1} parent=1 // pred_check
      _
    $region27: #{tpu_custom_call.1} parent=1 // pred_check_branch
      %313 = sbr.rel (0) target = $region29
    $region28: #{tpu_custom_call.1} parent=1 // pred_region
      %315 = vsyncadd [#allocation4], 0
      %s317 = sshll.u32 [#allocation8], 4
      %s318 = int_to_ptr.vmem [resolvable:$true] %s317
      %s319 = sshll.u32 %s3, 4
      %s320 = int_to_ptr.hbm [resolvable:$true] %s319
      %322 = dma.vmem_to_hbm [thread:$0]  %s318, 64, %s320, [#allocation4]
    $region29: #{tpu_custom_call.1} parent=1 // pred_fallthru
      _
    // Predicated region
    $region30: #{tpu_custom_call.1} parent=1 // pred_check
      _
    $region31: #{tpu_custom_call.1} parent=1 // pred_check_branch
      %324 = sbr.rel (0) target = $region33
    $region32: #{tpu_custom_call.1} parent=1 // pred_region
      %326 = vsyncadd [#allocation10], 0
      %s328 = sshll.u32 [#allocation9], 4
      %s329 = int_to_ptr.vmem [resolvable:$true] %s328
      %s330 = sshll.u32 %s4, 4
      %s331 = int_to_ptr.hbm [resolvable:$true] %s330
      %333 = dma.vmem_to_hbm [thread:$0]  %s329, 64, %s331, [#allocation10]
    $region33: #{tpu_custom_call.1} parent=1 // pred_fallthru
      _
    // Predicated region
    $region34: #{tpu_custom_call.1} parent=1 // pred_check
      _
    $region35: #{tpu_custom_call.1} parent=1 // pred_check_branch
      %335 = sbr.rel (0) target = $region37
    $region36: #{tpu_custom_call.1} parent=1 // pred_region
      %337 = dma.done [#allocation4], 64
    $region37: #{tpu_custom_call.1} parent=1 // pred_fallthru
      _
    // Predicated region
    $region38: #{tpu_custom_call.1} parent=1 // pred_check
      _
    $region39: #{tpu_custom_call.1} parent=1 // pred_check_branch
      %339 = sbr.rel (0) target = $region41
    $region40: #{tpu_custom_call.1} parent=1 // pred_region
      %341 = dma.done [#allocation10], 64
    $region41: #{tpu_custom_call.1} parent=1 // pred_fallthru
      _
    %342 = vsyncpa [#allocation3], 1
    %343 = vsyncpa [#allocation6], 1
    %344 = vsyncpa [#allocation4], 1
    %345 = vsyncpa [#allocation10], 1

</llo_original>
